<compile_context>
chip_gen: v5e
topology: v5e:2x2
jax: 0.10.0
libtpu: 0.0.40
codegen_flags: <defaults>
</compile_context>

<pallas_src>
import functools

import jax
import jax.numpy as jnp
from jax.experimental import pallas as pl
from jax.experimental.pallas import tpu as pltpu


def _norm_kernel(bm, x_ref, scale_ref, shift_ref, o_ref):
    # x_ref:     (bm, bn) tile of the flattened (N*C, H*W) input
    # scale_ref: (rows, 1) resident per-row 1/std        (f32)
    # shift_ref: (rows, 1) resident per-row -mean/std    (f32)
    i = pl.program_id(0)
    r0 = pl.multiple_of(i * bm, bm)
    scale = scale_ref[pl.ds(r0, bm), :]          # (bm, 1), broadcast over lanes
    shift = shift_ref[pl.ds(r0, bm), :]
    x = x_ref[...].astype(jnp.float32)           # compute in f32 regardless of dtype
    o_ref[...] = (x * scale + shift).astype(o_ref.dtype)


def _sublane_align(dtype) -> int:
    # Native sublane packing: 8 rows for 4-byte, 16 for 2-byte, 32 for 1-byte.
    return {4: 8, 2: 16, 1: 32}.get(jnp.dtype(dtype).itemsize, 8)


def _pick_block(dim: int, align: int, target: int) -> int:
    """Largest multiple of `align` that divides `dim` and is <= `target`.
    Falls back to the full extent when the dim is small or not aligned
    (full-extent blocks are exempt from the (8, 128) rule)."""
    if dim <= target or dim % align != 0:
        return dim
    best = align
    b = align
    while b <= target:
        if dim % b == 0:
            best = b
        b += align
    return best


def normalize(x, mean, std, *, target_block_bytes=4 * 1024 * 1024):
    """(x - mean[:,None,None]) / std[:,None,None] for NCHW `x`, via Pallas."""
    n, c, h, w = x.shape
    rows, cols = n * c, h * w
    itemsize = jnp.dtype(x.dtype).itemsize

    x2 = x.reshape(rows, cols)  # free row-major view, no data movement

    # Host-side prep: fold the divide. O(N*C) floats, negligible.
    mean_f = jnp.asarray(mean, jnp.float32).reshape(c)
    std_f = jnp.asarray(std, jnp.float32).reshape(c)
    scale = jnp.tile(1.0 / std_f, n).reshape(rows, 1)
    shift = jnp.tile(-mean_f / std_f, n).reshape(rows, 1)

    # --- tile selection --------------------------------------------------
    bm = _pick_block(rows, align=_sublane_align(x.dtype), target=256)
    lane_budget = max(128, target_block_bytes // max(1, bm * itemsize))
    bn = _pick_block(cols, align=128, target=min(cols, lane_budget))
    # Megacore (v7x): keep >= 2 grid steps when the problem is big enough
    # to be worth splitting across the two TensorCores.
    if (rows // bm) * (cols // bn) == 1 and cols >= 256 \
            and rows * cols * itemsize >= (2 << 20):
        bn = _pick_block(cols, align=128, target=max(128, cols // 2))
    grid = (rows // bm, cols // bn)

    block_bytes = bm * bn * itemsize
    # Double-buffered x-in + out ~= 4x block bytes plus the small resident
    # (rows, 1) f32 scale/shift; request that explicitly with headroom while
    # staying under v7x's 64 MiB physical VMEM.
    vmem_limit = int(min(60 * 1024 * 1024,
                         max(24 * 1024 * 1024,
                             6 * block_bytes + 16 * rows * 4)))

    cost = pl.CostEstimate(
        flops=2 * rows * cols,
        transcendentals=0,
        bytes_accessed=2 * rows * cols * itemsize + 2 * rows * 4,
    )

    out2 = pl.pallas_call(
        functools.partial(_norm_kernel, bm),
        grid=grid,
        out_shape=jax.ShapeDtypeStruct((rows, cols), x.dtype),
        in_specs=[
            pl.BlockSpec((bm, bn), lambda i, j: (i, j)),
            # Constant block index -> DMA'd once, stays resident across steps.
            pl.BlockSpec((rows, 1), lambda i, j: (0, 0)),
            pl.BlockSpec((rows, 1), lambda i, j: (0, 0)),
        ],
        out_specs=pl.BlockSpec((bm, bn), lambda i, j: (i, j)),
        compiler_params=pltpu.CompilerParams(
            dimension_semantics=("parallel", "parallel"),
            vmem_limit_bytes=vmem_limit),
        cost_estimate=cost,
        # NOTE: input_output_aliases={0: 0} would drop the full-size output
        # allocation for large NST images, but forces an extra copy when the
        # caller's buffer is not donated, so it is intentionally left off.
    )(x2, scale, shift)
    return out2.reshape(n, c, h, w)


class Normalization:
    """JAX/Pallas port of the PyTorch Normalization module (NCHW inputs)."""

    def __init__(self, mean, std):
        self.mean = jnp.asarray(mean, jnp.float32).reshape(-1)
        self.std = jnp.asarray(std, jnp.float32).reshape(-1)

    def forward(self, inputs):
        return normalize(inputs, self.mean, self.std)


if __name__ == "__main__":
    key = jax.random.PRNGKey(0)

    # ImageNet normalization constants used by nst_net's Normalization layer.
    mean = [0.485, 0.456, 0.406]
    std = [0.229, 0.224, 0.225]

    # Small NCHW image batch: batch=2, channels=3, spatial=16x16.
    x = jax.random.uniform(key, (2, 3, 16, 16), dtype=jnp.float32)

    module = Normalization(mean, std)
    out = jax.block_until_ready(module.forward(x))

    # Pure-JAX reference check.
    mean_a = jnp.asarray(mean, jnp.float32).reshape(-1, 1, 1)
    std_a = jnp.asarray(std, jnp.float32).reshape(-1, 1, 1)
    ref = (x - mean_a) / std_a

    assert out.shape == x.shape
    assert out.dtype == x.dtype
    assert jnp.allclose(out, ref, atol=1e-5, rtol=1e-5)

    print("KERNEL_OK")
</pallas_src>

<mosaic_0001>
module attributes {stable_mosaic.version = 11 : i64} {
  func.func @_norm_kernel(%arg0: i32, %arg1: i32, %arg2: memref<6x256xf32, #tpu.memory_space<vmem>>, %arg3: memref<6x1xf32, #tpu.memory_space<vmem>>, %arg4: memref<6x1xf32, #tpu.memory_space<vmem>>, %arg5: memref<6x256xf32, #tpu.memory_space<vmem>>) attributes {dimension_semantics = [#tpu.dimension_semantics<parallel>, #tpu.dimension_semantics<parallel>], iteration_bounds = array<i64: 1, 1>, scalar_prefetch = 0 : i64, scratch_operands = 0 : i64, tpu.core_type = #tpu.core_type<tc>, window_params = [{transform_indices = @transform_0, window_bounds = array<i64: 6, 256>}, {pipeline_mode = #tpu.pipeline_mode<synchronous>, transform_indices = @transform_1, window_bounds = array<i64: 6, 1>}, {pipeline_mode = #tpu.pipeline_mode<synchronous>, transform_indices = @transform_2, window_bounds = array<i64: 6, 1>}, {transform_indices = @transform_3, window_bounds = array<i64: 6, 256>}]} {
    %c6_i32 = arith.constant 6 : i32
    %0 = arith.muli %arg0, %c6_i32 : i32
    %1 = tpu.assume_multiple %0, 6 : i32
    %2 = arith.index_cast %1 : i32 to index
    %c0 = arith.constant 0 : index
    %3 = vector.load %arg3[%2, %c0] : memref<6x1xf32, #tpu.memory_space<vmem>>, vector<6x1xf32>
    %4 = arith.index_cast %1 : i32 to index
    %c0_0 = arith.constant 0 : index
    %5 = vector.load %arg4[%4, %c0_0] : memref<6x1xf32, #tpu.memory_space<vmem>>, vector<6x1xf32>
    %c0_1 = arith.constant 0 : index
    %c0_2 = arith.constant 0 : index
    %6 = vector.load %arg2[%c0_1, %c0_2] : memref<6x256xf32, #tpu.memory_space<vmem>>, vector<6x256xf32>
    %7 = vector.broadcast %3 : vector<6x1xf32> to vector<6x256xf32>
    %8 = arith.mulf %6, %7 : vector<6x256xf32>
    %9 = vector.broadcast %5 : vector<6x1xf32> to vector<6x256xf32>
    %10 = arith.addf %8, %9 : vector<6x256xf32>
    %c0_3 = arith.constant 0 : index
    %c0_4 = arith.constant 0 : index
    %11 = vector.load %arg5[%c0_3, %c0_4] : memref<6x256xf32, #tpu.memory_space<vmem>>, vector<6x256xf32>
    tpu.vector_store %arg5[%c0_3, %c0_4], %10 {strides = array<i32>} : memref<6x256xf32, #tpu.memory_space<vmem>>, vector<6x256xf32>,
    return
  }
  func.func @transform_0(%arg0: i32, %arg1: i32) -> (i32, i32) {
    %c0_i32 = arith.constant 0 : i32
    return %arg0, %arg1 : i32, i32
  }
  func.func @transform_1(%arg0: i32, %arg1: i32) -> (i32, i32) {
    %c0_i32 = arith.constant 0 : i32
    %c0_i32_0 = arith.constant 0 : i32
    %c0_i32_1 = arith.constant 0 : i32
    return %c0_i32, %c0_i32_0 : i32, i32
  }
  func.func @transform_2(%arg0: i32, %arg1: i32) -> (i32, i32) {
    %c0_i32 = arith.constant 0 : i32
    %c0_i32_0 = arith.constant 0 : i32
    %c0_i32_1 = arith.constant 0 : i32
    return %c0_i32, %c0_i32_0 : i32, i32
  }
  func.func @transform_3(%arg0: i32, %arg1: i32) -> (i32, i32) {
    %c0_i32 = arith.constant 0 : i32
    return %arg0, %arg1 : i32, i32
  }
}

</mosaic_0001>

<llo_original>
// kernel: tpu_custom_call.1
$region0: #{tpu_custom_call.1}
  #allocation0 [shape = 'u32[]', space=smem, size = 0x4, offset = 0x4, fixed_abs, tag = 'smem constant byte address 0x4 - core index']
  #allocation1 [shape = 'u32[72,128]{1,0:T(1,128)}', space=vmem, size = 0x9000, scoped, tag = 'internal scratch']
  %s0 = inlined_call_operand.vmem [shape: f32[6,256], index: 0, kind: input, shape index: {}]
  %s1 = inlined_call_operand.vmem [shape: f32[6,1], index: 1, kind: input, shape index: {}]
  %s2 = inlined_call_operand.vmem [shape: f32[6,1], index: 2, kind: input, shape index: {}]
  %s3 = inlined_call_operand.hbm [shape: f32[6,256], index: 3, kind: output, shape index: {}]
  %s4 = sld [smem:[#allocation0]]
  $region22: #{tpu_custom_call.1} parent=0
    _
  %s6 = ssub.s32 1, %s4
  %s7 = scalar_select 0, %s6, %s4
  $region1: #{tpu_custom_call.1} parent=0
    #allocation2 [shape = 'u8[8192]{0}', space=vmem, size = 0x2000, scoped, tag = 'output window, operand 0, single buffered']
    #allocation3 [shape = 's32[1]{0}', space=sflag, size = 0x4, scoped, tag = 'scoped memory for tpu_custom_call.1']
    %8 = vsyncpa [#allocation3], 0
    // Predicated region
    $region2: #{tpu_custom_call.1} parent=1 // pred_check
      _
    $region3: #{tpu_custom_call.1} parent=1 // pred_check_branch
      %10 = sbr.rel (0) target = $region5
    $region4: #{tpu_custom_call.1} parent=1 // pred_region
      _
    $region5: #{tpu_custom_call.1} parent=1 // pred_fallthru
      _
    // Predicated region
    $region6: #{tpu_custom_call.1} parent=1 // pred_check
      _
    $region7: #{tpu_custom_call.1} parent=1 // pred_check_branch
      %12 = sbr.rel (0) target = $region9
    $region8: #{tpu_custom_call.1} parent=1 // pred_region
      _
    $region9: #{tpu_custom_call.1} parent=1 // pred_fallthru
      _
    // Predicated region
    $region10: #{tpu_custom_call.1} parent=1 // pred_check
      _
    $region11: #{tpu_custom_call.1} parent=1 // pred_check_branch
      %14 = sbr.rel (0) target = $region13
    $region12: #{tpu_custom_call.1} parent=1 // pred_region
      _
    $region13: #{tpu_custom_call.1} parent=1 // pred_fallthru
      _
    %s15 = smul.u32 0, 6
    %s16 = scalar_lea.vmem %s1, %s15
    %v17 = vld [vmem:[%s16] sm:$0x3f]
    %s18 = scalar_lea.vmem %s2, %s15
    %v19 = vld [vmem:[%s18] sm:$0x3f]
    %v20 = vld [vmem:[%s0] sm:$0x3f]
    %v21 = vld [vmem:[%s0 + $0x8] sm:$0x3f]
    %23 = vset.pattern.permute.xlu0 0
    %24 = vperm.xlu0 %23, %v17
    %v25 = vpop.permute.xlu0 %24
    %v27 = vmul.f32 %v20, %v25
    %v28 = vmul.f32 %v21, %v25
    %30 = vset.pattern.permute.xlu0 0
    %31 = vperm.xlu0 %30, %v19
    %v32 = vpop.permute.xlu0 %31
    %v34 = vadd.f32 %v27, %v32
    %v35 = vadd.f32 %v28, %v32
    %36 = vst [vmem:[#allocation2] sm:$0x3f] %v34
    %37 = vst [vmem:[#allocation2 + $0x8] sm:$0x3f] %v35
    // Predicated region
    $region14: #{tpu_custom_call.1} parent=1 // pred_check
      _
    $region15: #{tpu_custom_call.1} parent=1 // pred_check_branch
      %39 = sbr.rel (0) target = $region17
    $region16: #{tpu_custom_call.1} parent=1 // pred_region
      %41 = vsyncadd [#allocation3], 0
      %s43 = sshll.u32 [#allocation2], 4
      %s44 = int_to_ptr.vmem [resolvable:$true] %s43
      %s45 = sshll.u32 %s3, 4
      %s46 = int_to_ptr.hbm [resolvable:$true] %s45
      %48 = dma.vmem_to_hbm [thread:$0]  %s44, 256, %s46, [#allocation3]
    $region17: #{tpu_custom_call.1} parent=1 // pred_fallthru
      _
    // Predicated region
    $region18: #{tpu_custom_call.1} parent=1 // pred_check
      _
    $region19: #{tpu_custom_call.1} parent=1 // pred_check_branch
      %50 = sbr.rel (0) target = $region21
    $region20: #{tpu_custom_call.1} parent=1 // pred_region
      %52 = dma.done [#allocation3], 256
    $region21: #{tpu_custom_call.1} parent=1 // pred_fallthru
      _
    %53 = vsyncpa [#allocation3], 1

</llo_original>
